<compile_context>
chip_gen: v5e
topology: v5e:2x2
jax: 0.10.0
libtpu: 0.0.40
codegen_flags: <defaults>
</compile_context>

<pallas_src>
import jax
import jax.numpy as jnp
from jax.experimental import pallas as pl
from jax.experimental.pallas import tpu as pltpu


# ----------------------------------------------------------------------------
# Kernels
# ----------------------------------------------------------------------------

def gated_fusion_kernel(h_ref, x_ref, wh_ref, wx_ref, whx_ref, b_ref, o_ref):
    """Resident-weight path.  h/x/o: (tm, H); wh/wx/whx: (H, H); b: (1, H)."""
    h = h_ref[...]                      # native dtype -> MXU at full rate
    x = x_ref[...]

    # Folded linear: logits = h@W_h + x@W_x + (h*x)@W_hx + b   (f32 accumulate)
    logits = jnp.dot(h, wh_ref[...], preferred_element_type=jnp.float32)
    logits = logits + jnp.dot(x, wx_ref[...], preferred_element_type=jnp.float32)
    logits = logits + jnp.dot(h * x, whx_ref[...],
                              preferred_element_type=jnp.float32)
    logits = logits + b_ref[...].astype(jnp.float32)

    z = jax.nn.sigmoid(logits)          # f32 gate (v5e has no bf16 VPU/EUP)
    hf = h.astype(jnp.float32)
    xf = x.astype(jnp.float32)
    # (1-z)*h + z*x  ==  h + z*(x - h)   (one fewer VPU op per element)
    o_ref[...] = (hf + z * (xf - hf)).astype(o_ref.dtype)


def gated_fusion_kernel_coltiled(h_ref, x_ref, wh_ref, wx_ref, whx_ref,
                                 b_ref, o_ref):
    """Column-tiled path for large H.  h/x: (tm, H); weights: (H, tn);
    b: (1, tn); o: (tm, tn).  Weight columns stream along grid axis 1 while
    the h/x row tile stays resident."""
    tn = o_ref.shape[-1]
    j = pl.program_id(1)
    col0 = pl.multiple_of(j * tn, tn)

    h = h_ref[...]
    x = x_ref[...]

    logits = jnp.dot(h, wh_ref[...], preferred_element_type=jnp.float32)
    logits = logits + jnp.dot(x, wx_ref[...], preferred_element_type=jnp.float32)
    logits = logits + jnp.dot(h * x, whx_ref[...],
                              preferred_element_type=jnp.float32)
    logits = logits + b_ref[...].astype(jnp.float32)

    z = jax.nn.sigmoid(logits)
    hc = h_ref[:, pl.ds(col0, tn)].astype(jnp.float32)
    xc = x_ref[:, pl.ds(col0, tn)].astype(jnp.float32)
    o_ref[...] = (hc + z * (xc - hc)).astype(o_ref.dtype)


# ----------------------------------------------------------------------------
# Parameter folding (hoist this to parameter-load time in real use)
# ----------------------------------------------------------------------------

def fold_gated_fusion_params(w, b, compute_dtype=None):
    """Fold the (4H, H) weight (torch weight.T) into three (H, H) matrices:
        feats@W = h@W1 + x@W2 + (h*x)@W3 + (h-x)@W4
                = h@(W1+W4) + x@(W2-W4) + (h*x)@W3
    Optionally cast the folded weights to the matmul (input) dtype once here
    so the kernel never casts weights.  Bias stays in its own dtype (added to
    the f32 accumulator inside the kernel)."""
    H = w.shape[1]
    w1 = w[0 * H:1 * H]
    w2 = w[1 * H:2 * H]
    w3 = w[2 * H:3 * H]
    w4 = w[3 * H:4 * H]
    w_h, w_x, w_hx = w1 + w4, w2 - w4, w3
    if compute_dtype is not None:
        w_h = w_h.astype(compute_dtype)
        w_x = w_x.astype(compute_dtype)
        w_hx = w_hx.astype(compute_dtype)
    return w_h, w_x, w_hx, b.reshape(1, H)


def _round_up(a, m):
    return ((a + m - 1) // m) * m


# ----------------------------------------------------------------------------
# Wrappers
# ----------------------------------------------------------------------------

def gated_fusion_folded(h_state, x, w_h, w_x, w_hx, b2, *,
                        tm=512, vmem_limit_bytes=None):
    """h_state, x: [..., H]; w_h/w_x/w_hx: (H, H) folded weights; b2: (1, H)."""
    orig_shape = h_state.shape
    H = orig_shape[-1]
    h2 = h_state.reshape(-1, H)
    x2 = x.reshape(-1, H)
    M = h2.shape[0]

    in_itemsize = jnp.dtype(h_state.dtype).itemsize
    w_itemsize = jnp.dtype(w_h.dtype).itemsize

    # --- generation-aware VMEM budget (~70% of physical capacity) ----------
    if vmem_limit_bytes is None:
        try:
            cap = int(pltpu.get_tpu_info().vmem_capacity_bytes)
        except Exception:
            cap = 64 << 20          # conservative fallback (v7x-sized)
        vmem_budget = int(0.70 * cap)
    else:
        vmem_budget = int(vmem_limit_bytes)

    # --- row tile ------------------------------------------------------------
    if M < 8:
        tm_rows = M                                  # block == full array dim
    else:
        tm_rows = min(tm, _round_up(M, 8))
        # Ensure >= 2 row tiles when possible so both v7x TensorCores get work
        # (no effect on single-TC v5e/v6e beyond a slightly smaller slab).
        if M > 8 and pl.cdiv(M, tm_rows) < 2:
            tm_rows = max(8, _round_up(pl.cdiv(M, 2), 8))

    # --- VMEM accounting ------------------------------------------------------
    def resident_bytes(tm_):
        wb = (3 * H * H + H) * w_itemsize            # single-buffered weights
        tiles = 3 * 2 * tm_ * H * in_itemsize        # h, x, out; double-buffered
        temps = 4 * tm_ * H * 4                      # logits, z, hf, xf (f32)
        return wb + tiles + temps

    def coltiled_bytes(tm_, tn_):
        wb = 3 * 2 * H * tn_ * w_itemsize + 2 * tn_ * w_itemsize
        tiles = 2 * 2 * tm_ * H * in_itemsize + 2 * tm_ * tn_ * in_itemsize
        temps = 4 * tm_ * tn_ * 4
        return wb + tiles + temps

    col_tile = None
    if resident_bytes(tm_rows) > vmem_budget:
        if H % 128 == 0:
            # Weights too large to keep resident (e.g. large H on v7x 64 MiB):
            # stream (H, tn) weight columns; h/x stay resident across columns.
            col_tile = 128
            for cand in (1024, 512, 256, 128):
                if H % cand == 0 and coltiled_bytes(tm_rows, cand) <= vmem_budget:
                    col_tile = cand
                    break
        else:
            # Cannot column-tile a non-128-multiple H; shrink the row tile.
            while tm_rows > 8 and resident_bytes(tm_rows) > vmem_budget:
                tm_rows = max(8, _round_up(tm_rows // 2, 8))

    vmem_limit = vmem_budget

    if col_tile is None:
        grid = (pl.cdiv(M, tm_rows),)
        out = pl.pallas_call(
            gated_fusion_kernel,
            out_shape=jax.ShapeDtypeStruct((M, H), h_state.dtype),
            grid_spec=pltpu.PrefetchScalarGridSpec(
                num_scalar_prefetch=0,
                grid=grid,
                in_specs=[
                    pl.BlockSpec((tm_rows, H), lambda i: (i, 0)),   # h rows
                    pl.BlockSpec((tm_rows, H), lambda i: (i, 0)),   # x rows
                    pl.BlockSpec((H, H), lambda i: (0, 0),          # W_h
                                 pipeline_mode=pl.Buffered(1)),
                    pl.BlockSpec((H, H), lambda i: (0, 0),          # W_x
                                 pipeline_mode=pl.Buffered(1)),
                    pl.BlockSpec((H, H), lambda i: (0, 0),          # W_hx
                                 pipeline_mode=pl.Buffered(1)),
                    pl.BlockSpec((1, H), lambda i: (0, 0),          # bias
                                 pipeline_mode=pl.Buffered(1)),
                ],
                out_specs=pl.BlockSpec((tm_rows, H), lambda i: (i, 0)),
            ),
            compiler_params=pltpu.CompilerParams(
                dimension_semantics=("parallel",),
                vmem_limit_bytes=vmem_limit,
            ),
        )(h2, x2, w_h, w_x, w_hx, b2)
    else:
        tn = col_tile
        grid = (pl.cdiv(M, tm_rows), H // tn)
        out = pl.pallas_call(
            gated_fusion_kernel_coltiled,
            out_shape=jax.ShapeDtypeStruct((M, H), h_state.dtype),
            grid_spec=pltpu.PrefetchScalarGridSpec(
                num_scalar_prefetch=0,
                grid=grid,
                in_specs=[
                    pl.BlockSpec((tm_rows, H), lambda i, j: (i, 0)),  # h rows
                    pl.BlockSpec((tm_rows, H), lambda i, j: (i, 0)),  # x rows
                    pl.BlockSpec((H, tn), lambda i, j: (0, j)),       # W_h cols
                    pl.BlockSpec((H, tn), lambda i, j: (0, j)),       # W_x cols
                    pl.BlockSpec((H, tn), lambda i, j: (0, j)),       # W_hx cols
                    pl.BlockSpec((1, tn), lambda i, j: (0, j)),       # bias cols
                ],
                out_specs=pl.BlockSpec((tm_rows, tn), lambda i, j: (i, j)),
            ),
            compiler_params=pltpu.CompilerParams(
                dimension_semantics=("parallel", "arbitrary"),
                vmem_limit_bytes=vmem_limit,
            ),
        )(h2, x2, w_h, w_x, w_hx, b2)

    return out.reshape(orig_shape)


def gated_fusion(h_state, x, w, b, **kwargs):
    """Convenience wrapper: folds (w, b) per call.  For repeated use, call
    fold_gated_fusion_params once at parameter-load time and use
    gated_fusion_folded directly."""
    folded = fold_gated_fusion_params(w, b, compute_dtype=h_state.dtype)
    return gated_fusion_folded(h_state, x, *folded, **kwargs)


def gated_fusion_ref(h_state, x, w, b):
    feats = jnp.concatenate([h_state, x, h_state * x, h_state - x], axis=-1)
    z = jax.nn.sigmoid(feats @ w + b)
    return (1.0 - z) * h_state + z * x


if __name__ == "__main__":
    hidden = 32
    batch, seq = 2, 8

    key = jax.random.PRNGKey(0)
    k_h, k_x, k_w, k_b = jax.random.split(key, 4)

    h_state = jax.random.normal(k_h, (batch, seq, hidden), dtype=jnp.float32)
    x_in = jax.random.normal(k_x, (batch, seq, hidden), dtype=jnp.float32)

    # Deterministic parameter init mimicking nn.Linear(4H, H):
    # uniform(-1/sqrt(fan_in), 1/sqrt(fan_in)), fan_in = 4*hidden.
    bound = 1.0 / (4 * hidden) ** 0.5
    w = jax.random.uniform(k_w, (4 * hidden, hidden), jnp.float32, -bound, bound)
    b = jax.random.uniform(k_b, (hidden,), jnp.float32, -bound, bound)

    out = gated_fusion(h_state, x_in, w, b)
    out = jax.block_until_ready(out)

    ref = gated_fusion_ref(h_state, x_in, w, b)
    assert out.shape == h_state.shape
    assert jnp.allclose(out, ref, atol=1e-5, rtol=1e-5)

    print("KERNEL_OK")
</pallas_src>

<mosaic_0001>
module attributes {stable_mosaic.version = 11 : i64} {
  func.func @gated_fusion_kernel(%arg0: i32, %arg1: memref<8x32xf32, #tpu.memory_space<vmem>>, %arg2: memref<8x32xf32, #tpu.memory_space<vmem>>, %arg3: memref<32x32xf32, #tpu.memory_space<vmem>>, %arg4: memref<32x32xf32, #tpu.memory_space<vmem>>, %arg5: memref<32x32xf32, #tpu.memory_space<vmem>>, %arg6: memref<1x32xf32, #tpu.memory_space<vmem>>, %arg7: memref<8x32xf32, #tpu.memory_space<vmem>>) attributes {dimension_semantics = [#tpu.dimension_semantics<parallel>], iteration_bounds = array<i64: 2>, scalar_prefetch = 0 : i64, scratch_operands = 0 : i64, tpu.core_type = #tpu.core_type<tc>, window_params = [{transform_indices = @transform_0, window_bounds = array<i64: 8, 32>}, {transform_indices = @transform_1, window_bounds = array<i64: 8, 32>}, {pipeline_mode = #tpu.pipeline_mode<synchronous>, transform_indices = @transform_2, window_bounds = array<i64: 32, 32>}, {pipeline_mode = #tpu.pipeline_mode<synchronous>, transform_indices = @transform_3, window_bounds = array<i64: 32, 32>}, {pipeline_mode = #tpu.pipeline_mode<synchronous>, transform_indices = @transform_4, window_bounds = array<i64: 32, 32>}, {pipeline_mode = #tpu.pipeline_mode<synchronous>, transform_indices = @transform_5, window_bounds = array<i64: 1, 32>}, {transform_indices = @transform_6, window_bounds = array<i64: 8, 32>}]} {
    %c0 = arith.constant 0 : index
    %c0_0 = arith.constant 0 : index
    %0 = vector.load %arg1[%c0, %c0_0] : memref<8x32xf32, #tpu.memory_space<vmem>>, vector<8x32xf32>
    %c0_1 = arith.constant 0 : index
    %c0_2 = arith.constant 0 : index
    %1 = vector.load %arg2[%c0_1, %c0_2] : memref<8x32xf32, #tpu.memory_space<vmem>>, vector<8x32xf32>
    %c0_3 = arith.constant 0 : index
    %c0_4 = arith.constant 0 : index
    %2 = vector.load %arg3[%c0_3, %c0_4] : memref<32x32xf32, #tpu.memory_space<vmem>>, vector<32x32xf32>
    %cst = arith.constant dense<0.000000e+00> : vector<8x32xf32>
    %3 = tpu.matmul %0, %2, %cst {dimension_numbers = #tpu.dot_dimension_numbers<[1], [0], [0], [1], [0, 0, 1, 1], [], []>} : vector<8x32xf32>, vector<32x32xf32>, vector<8x32xf32> -> vector<8x32xf32>
    %c0_5 = arith.constant 0 : index
    %c0_6 = arith.constant 0 : index
    %4 = vector.load %arg4[%c0_5, %c0_6] : memref<32x32xf32, #tpu.memory_space<vmem>>, vector<32x32xf32>
    %cst_7 = arith.constant dense<0.000000e+00> : vector<8x32xf32>
    %5 = tpu.matmul %1, %4, %cst_7 {dimension_numbers = #tpu.dot_dimension_numbers<[1], [0], [0], [1], [0, 0, 1, 1], [], []>} : vector<8x32xf32>, vector<32x32xf32>, vector<8x32xf32> -> vector<8x32xf32>
    %6 = arith.addf %3, %5 : vector<8x32xf32>
    %7 = arith.mulf %0, %1 : vector<8x32xf32>
    %c0_8 = arith.constant 0 : index
    %c0_9 = arith.constant 0 : index
    %8 = vector.load %arg5[%c0_8, %c0_9] : memref<32x32xf32, #tpu.memory_space<vmem>>, vector<32x32xf32>
    %cst_10 = arith.constant dense<0.000000e+00> : vector<8x32xf32>
    %9 = tpu.matmul %7, %8, %cst_10 {dimension_numbers = #tpu.dot_dimension_numbers<[1], [0], [0], [1], [0, 0, 1, 1], [], []>} : vector<8x32xf32>, vector<32x32xf32>, vector<8x32xf32> -> vector<8x32xf32>
    %10 = arith.addf %6, %9 : vector<8x32xf32>
    %c0_11 = arith.constant 0 : index
    %c0_12 = arith.constant 0 : index
    %11 = vector.load %arg6[%c0_11, %c0_12] : memref<1x32xf32, #tpu.memory_space<vmem>>, vector<1x32xf32>
    %12 = vector.broadcast %11 : vector<1x32xf32> to vector<8x32xf32>
    %13 = arith.addf %10, %12 : vector<8x32xf32>
    %14 = arith.negf %13 : vector<8x32xf32>
    %15 = math.exp %14 : vector<8x32xf32>
    %cst_13 = arith.constant 1.000000e+00 : f32
    %16 = vector.broadcast %cst_13 : f32 to vector<8x32xf32>
    %17 = arith.addf %16, %15 : vector<8x32xf32>
    %18 = arith.divf %16, %17 : vector<8x32xf32>
    %19 = arith.subf %1, %0 : vector<8x32xf32>
    %20 = arith.mulf %18, %19 : vector<8x32xf32>
    %21 = arith.addf %0, %20 : vector<8x32xf32>
    %c0_14 = arith.constant 0 : index
    %c0_15 = arith.constant 0 : index
    %22 = vector.load %arg7[%c0_14, %c0_15] : memref<8x32xf32, #tpu.memory_space<vmem>>, vector<8x32xf32>
    tpu.vector_store %arg7[%c0_14, %c0_15], %21 {strides = array<i32>} : memref<8x32xf32, #tpu.memory_space<vmem>>, vector<8x32xf32>,
    return
  }
  func.func @transform_0(%arg0: i32) -> (i32, i32) {
    %c0_i32 = arith.constant 0 : i32
    %c0_i32_0 = arith.constant 0 : i32
    return %arg0, %c0_i32 : i32, i32
  }
  func.func @transform_1(%arg0: i32) -> (i32, i32) {
    %c0_i32 = arith.constant 0 : i32
    %c0_i32_0 = arith.constant 0 : i32
    return %arg0, %c0_i32 : i32, i32
  }
  func.func @transform_2(%arg0: i32) -> (i32, i32) {
    %c0_i32 = arith.constant 0 : i32
    %c0_i32_0 = arith.constant 0 : i32
    %c0_i32_1 = arith.constant 0 : i32
    return %c0_i32, %c0_i32_0 : i32, i32
  }
  func.func @transform_3(%arg0: i32) -> (i32, i32) {
    %c0_i32 = arith.constant 0 : i32
    %c0_i32_0 = arith.constant 0 : i32
    %c0_i32_1 = arith.constant 0 : i32
    return %c0_i32, %c0_i32_0 : i32, i32
  }
  func.func @transform_4(%arg0: i32) -> (i32, i32) {
    %c0_i32 = arith.constant 0 : i32
    %c0_i32_0 = arith.constant 0 : i32
    %c0_i32_1 = arith.constant 0 : i32
    return %c0_i32, %c0_i32_0 : i32, i32
  }
  func.func @transform_5(%arg0: i32) -> (i32, i32) {
    %c0_i32 = arith.constant 0 : i32
    %c0_i32_0 = arith.constant 0 : i32
    %c0_i32_1 = arith.constant 0 : i32
    return %c0_i32, %c0_i32_0 : i32, i32
  }
  func.func @transform_6(%arg0: i32) -> (i32, i32) {
    %c0_i32 = arith.constant 0 : i32
    %c0_i32_0 = arith.constant 0 : i32
    return %arg0, %c0_i32 : i32, i32
  }
}

</mosaic_0001>

<llo_original>
// kernel: tpu_custom_call.1
$region0: #{tpu_custom_call.1}
  #allocation0 [shape = 'u32[]', space=smem, size = 0x4, offset = 0x4, fixed_abs, tag = 'smem constant byte address 0x4 - core index']
  #allocation1 [shape = 'u32[72,128]{1,0:T(1,128)}', space=vmem, size = 0x9000, scoped, tag = 'internal scratch']
  %s0 = inlined_call_operand.hbm [shape: f32[16,32], index: 0, kind: input, shape index: {}]
  %s1 = inlined_call_operand.hbm [shape: f32[16,32], index: 1, kind: input, shape index: {}]
  %s2 = inlined_call_operand.hbm [shape: f32[32,32], index: 2, kind: input, shape index: {}]
  %s3 = inlined_call_operand.hbm [shape: f32[32,32], index: 3, kind: input, shape index: {}]
  %s4 = inlined_call_operand.hbm [shape: f32[32,32], index: 4, kind: input, shape index: {}]
  %s5 = inlined_call_operand.vmem [shape: f32[1,32], index: 5, kind: input, shape index: {}]
  %s6 = inlined_call_operand.hbm [shape: f32[16,32], index: 6, kind: output, shape index: {}]
  %s7 = sld [smem:[#allocation0]]
  $region77: #{tpu_custom_call.1} parent=0
    _
  %s9 = ssub.s32 1, %s7
  %s10 = scalar_select 0, %s9, %s7
  $region1: #{tpu_custom_call.1} parent=0
    #allocation2 [shape = 'u8[8192]{0}', space=vmem, size = 0x2000, scoped, tag = 'input window, operand 0']
    #allocation3 [shape = 's32[2]{0}', space=sflag, size = 0x8, scoped, tag = 'scoped memory for tpu_custom_call.1']
    #allocation4 [shape = 's32[2]{0}', space=sflag, size = 0x8, scoped, tag = 'scoped memory for tpu_custom_call.1']
    #allocation5 [shape = 'u8[8192]{0}', space=vmem, size = 0x2000, scoped, tag = 'input window, operand 1']
    #allocation6 [shape = 's32[2]{0}', space=sflag, size = 0x8, scoped, tag = 'scoped memory for tpu_custom_call.1']
    #allocation7 [shape = 'u8[16384]{0}', space=vmem, size = 0x4000, scoped, tag = 'input window, operand 2, single buffered']
    #allocation8 [shape = 'u8[16384]{0}', space=vmem, size = 0x4000, scoped, tag = 'input window, operand 3, single buffered']
    #allocation9 [shape = 's32[1]{0}', space=sflag, size = 0x4, scoped, tag = 'scoped memory for tpu_custom_call.1']
    #allocation10 [shape = 'u8[16384]{0}', space=vmem, size = 0x4000, scoped, tag = 'input window, operand 4, single buffered']
    #allocation11 [shape = 'u8[8192]{0}', space=vmem, size = 0x2000, scoped, tag = 'output window, operand 0']
    %11 = vsyncpa [#allocation3], 0
    %s12 = scalar_lea.sflag [#allocation3], 1
    %13 = vsyncpa %s12, 0
    %14 = vsyncpa [#allocation6], 0
    %s15 = scalar_lea.sflag [#allocation6], 1
    %16 = vsyncpa %s15, 0
    %17 = vsyncpa [#allocation9], 0
    %18 = vsyncpa [#allocation4], 0
    %s19 = scalar_lea.sflag [#allocation4], 1
    %20 = vsyncpa %s19, 0
    loop: start=0, step=1, limit=4
    $region2: #{tpu_custom_call.1} parent=1 // loop_pre_header
      _
    $region3: #{tpu_custom_call.1} parent=1 // loop_header
      %s22 = sphi 0, %s26
      %p23 = scmp.ge.s32.totalorder %s22, 4
      %s32 = sphi 0, %s34
      %s35 = sphi 0, %s32
      %s36 = sphi 0, %s35
      %s52 = sphi 0, %s36
      %s58 = sphi 0, %s60
      %s61 = sphi 0, %s58
      %s62 = sphi 0, %s61
      %s78 = sphi 0, %s62
      %s82 = sphi 0, %s82
      %s84 = sphi 0, %s82
      %s85 = sphi 0, %s84
      %s99 = sphi 0, %s85
      %s103 = sphi 0, %s103
      %s105 = sphi 0, %s103
      %s106 = sphi 0, %s105
      %s120 = sphi 0, %s106
      %s124 = sphi 0, %s124
      %s126 = sphi 0, %s124
      %s127 = sphi 0, %s126
      %s141 = sphi 0, %s127
      %s145 = sphi 0, %s145
      %s147 = sphi 0, %s145
      %s148 = sphi 0, %s147
      %s162 = sphi 0, %s148
      %s168 = sphi 0, %s170
      %s171 = sphi 0, %s168
      %s172 = sphi 0, %s171
      %s188 = sphi 0, %s172
    $region4: #{tpu_custom_call.1} parent=1 // loop_header_branch
      %25 = sbr.rel (%p23) target = $region8
    $region5: #{tpu_custom_call.1} parent=1 // loop_body
      %s27 = ssub.s32 %s22, 1
      %s28 = ssub.s32 %s22, 2
      %s29 = sadd.s32 %s22, 1
      %s30 = ssub.s32 %s22, %s29
      %p31 = scmp.eq.s32.totalorder %s30, 0
      %s33 = sadd.s32 %s32, 1
      %s34 = scalar_select %p31, %s32, %s33
      %p37 = pneg %p31
      %p38 = scmp.eq.s32.totalorder %s22, 1
      %p39 = por %p37, %p38
      %p40 = scmp.ne.s32.totalorder %s32, %s35
      %p41 = scmp.eq.s32.totalorder %s22, 0
      %p42 = por %p40, %p41
      %p43 = scmp.ne.s32.totalorder %s32, %s35
      %p44 = scmp.eq.s32.totalorder %s27, 1
      %p45 = por %p43, %p44
      %p46 = scmp.ne.s32.totalorder %s35, %s36
      %p47 = scmp.eq.s32.totalorder %s27, 0
      %p48 = por %p46, %p47
      %p49 = scmp.ne.s32.totalorder %s35, %s36
      %p50 = scmp.eq.s32.totalorder %s28, 1
      %p51 = por %p49, %p50
      %p53 = scmp.ne.s32.totalorder %s36, %s52
      %p54 = scmp.eq.s32.totalorder %s28, 0
      %p55 = por %p53, %p54
      %s56 = ssub.s32 %s22, %s29
      %p57 = scmp.eq.s32.totalorder %s56, 0
      %s59 = sadd.s32 %s58, 1
      %s60 = scalar_select %p57, %s58, %s59
      %p63 = pneg %p57
      %p64 = scmp.eq.s32.totalorder %s22, 1
      %p65 = por %p63, %p64
      %p66 = scmp.ne.s32.totalorder %s58, %s61
      %p67 = scmp.eq.s32.totalorder %s22, 0
      %p68 = por %p66, %p67
      %p69 = scmp.ne.s32.totalorder %s58, %s61
      %p70 = scmp.eq.s32.totalorder %s27, 1
      %p71 = por %p69, %p70
      %p72 = scmp.ne.s32.totalorder %s61, %s62
      %p73 = scmp.eq.s32.totalorder %s27, 0
      %p74 = por %p72, %p73
      %p75 = scmp.ne.s32.totalorder %s61, %s62
      %p76 = scmp.eq.s32.totalorder %s28, 1
      %p77 = por %p75, %p76
      %p79 = scmp.ne.s32.totalorder %s62, %s78
      %p80 = scmp.eq.s32.totalorder %s28, 0
      %p81 = por %p79, %p80
      %s83 = sadd.s32 %s82, 1
      %p86 = scmp.eq.s32.totalorder %s22, 1
      %p87 = scmp.ne.s32.totalorder %s82, %s84
      %p88 = scmp.eq.s32.totalorder %s22, 0
      %p89 = por %p87, %p88
      %p90 = scmp.ne.s32.totalorder %s82, %s84
      %p91 = scmp.eq.s32.totalorder %s27, 1
      %p92 = por %p90, %p91
      %p93 = scmp.ne.s32.totalorder %s84, %s85
      %p94 = scmp.eq.s32.totalorder %s27, 0
      %p95 = por %p93, %p94
      %p96 = scmp.ne.s32.totalorder %s84, %s85
      %p97 = scmp.eq.s32.totalorder %s28, 1
      %p98 = por %p96, %p97
      %p100 = scmp.ne.s32.totalorder %s85, %s99
      %p101 = scmp.eq.s32.totalorder %s28, 0
      %p102 = por %p100, %p101
      %s104 = sadd.s32 %s103, 1
      %p107 = scmp.eq.s32.totalorder %s22, 1
      %p108 = scmp.ne.s32.totalorder %s103, %s105
      %p109 = scmp.eq.s32.totalorder %s22, 0
      %p110 = por %p108, %p109
      %p111 = scmp.ne.s32.totalorder %s103, %s105
      %p112 = scmp.eq.s32.totalorder %s27, 1
      %p113 = por %p111, %p112
      %p114 = scmp.ne.s32.totalorder %s105, %s106
      %p115 = scmp.eq.s32.totalorder %s27, 0
      %p116 = por %p114, %p115
      %p117 = scmp.ne.s32.totalorder %s105, %s106
      %p118 = scmp.eq.s32.totalorder %s28, 1
      %p119 = por %p117, %p118
      %p121 = scmp.ne.s32.totalorder %s106, %s120
      %p122 = scmp.eq.s32.totalorder %s28, 0
      %p123 = por %p121, %p122
      %s125 = sadd.s32 %s124, 1
      %p128 = scmp.eq.s32.totalorder %s22, 1
      %p129 = scmp.ne.s32.totalorder %s124, %s126
      %p130 = scmp.eq.s32.totalorder %s22, 0
      %p131 = por %p129, %p130
      %p132 = scmp.ne.s32.totalorder %s124, %s126
      %p133 = scmp.eq.s32.totalorder %s27, 1
      %p134 = por %p132, %p133
      %p135 = scmp.ne.s32.totalorder %s126, %s127
      %p136 = scmp.eq.s32.totalorder %s27, 0
      %p137 = por %p135, %p136
      %p138 = scmp.ne.s32.totalorder %s126, %s127
      %p139 = scmp.eq.s32.totalorder %s28, 1
      %p140 = por %p138, %p139
      %p142 = scmp.ne.s32.totalorder %s127, %s141
      %p143 = scmp.eq.s32.totalorder %s28, 0
      %p144 = por %p142, %p143
      %s146 = sadd.s32 %s145, 1
      %p149 = scmp.eq.s32.totalorder %s22, 1
      %p150 = scmp.ne.s32.totalorder %s145, %s147
      %p151 = scmp.eq.s32.totalorder %s22, 0
      %p152 = por %p150, %p151
      %p153 = scmp.ne.s32.totalorder %s145, %s147
      %p154 = scmp.eq.s32.totalorder %s27, 1
      %p155 = por %p153, %p154
      %p156 = scmp.ne.s32.totalorder %s147, %s148
      %p157 = scmp.eq.s32.totalorder %s27, 0
      %p158 = por %p156, %p157
      %p159 = scmp.ne.s32.totalorder %s147, %s148
      %p160 = scmp.eq.s32.totalorder %s28, 1
      %p161 = por %p159, %p160
      %p163 = scmp.ne.s32.totalorder %s148, %s162
      %p164 = scmp.eq.s32.totalorder %s28, 0
      %p165 = por %p163, %p164
      %s166 = ssub.s32 %s22, %s29
      %p167 = scmp.eq.s32.totalorder %s166, 0
      %s169 = sadd.s32 %s168, 1
      %s170 = scalar_select %p167, %s168, %s169
      %p173 = pneg %p167
      %p174 = scmp.eq.s32.totalorder %s22, 1
      %p175 = por %p173, %p174
      %p176 = scmp.ne.s32.totalorder %s168, %s171
      %p177 = scmp.eq.s32.totalorder %s22, 0
      %p178 = por %p176, %p177
      %p179 = scmp.ne.s32.totalorder %s168, %s171
      %p180 = scmp.eq.s32.totalorder %s27, 1
      %p181 = por %p179, %p180
      %p182 = scmp.ne.s32.totalorder %s171, %s172
      %p183 = scmp.eq.s32.totalorder %s27, 0
      %p184 = por %p182, %p183
      %p185 = scmp.ne.s32.totalorder %s171, %s172
      %p186 = scmp.eq.s32.totalorder %s28, 1
      %p187 = por %p185, %p186
      %p189 = scmp.ne.s32.totalorder %s172, %s188
      %p190 = scmp.eq.s32.totalorder %s28, 0
      %p191 = por %p189, %p190
      %p192 = scmp.le.s32.totalorder 1, %s22
      %p193 = scmp.lt.s32.totalorder %s22, 3
      %p194 = pnand %p192, %p193
      %p195 = pneg %p194
      // Predicated region
      $region9: #{tpu_custom_call.1} parent=5 // pred_check
        _
      $region10: #{tpu_custom_call.1} parent=5 // pred_check_branch
        %197 = sbr.rel (%p194) target = $region12
      $region11: #{tpu_custom_call.1} parent=5 // pred_region
        %s198 = ssub.s32 %s22, 1
        // Predicated region
        $region13: #{tpu_custom_call.1} parent=11 // pred_check
          %p199 = pneg %p95
        $region14: #{tpu_custom_call.1} parent=11 // pred_check_branch
          %201 = sbr.rel (%p199) target = $region16
        $region15: #{tpu_custom_call.1} parent=11 // pred_region
          %203 = vsyncadd [#allocation6], 0
          %s204 = sshll.u32 %s2, 4
          %s205 = int_to_ptr.hbm [resolvable:$true] %s204
          %s206 = sshll.u32 [#allocation7], 4
          %s207 = int_to_ptr.vmem [resolvable:$true] %s206
          %212 = dma.hbm_to_vmem [thread:$0]  %s205, 512, %s207, [#allocation6], 128, 128, 8
        $region16: #{tpu_custom_call.1} parent=11 // pred_fallthru
          _
        // Predicated region
        $region17: #{tpu_custom_call.1} parent=11 // pred_check
          %p213 = pneg %p116
        $region18: #{tpu_custom_call.1} parent=11 // pred_check_branch
          %215 = sbr.rel (%p213) target = $region20
        $region19: #{tpu_custom_call.1} parent=11 // pred_region
          %217 = vsyncadd [#allocation9], 0
          %s218 = sshll.u32 %s3, 4
          %s219 = int_to_ptr.hbm [resolvable:$true] %s218
          %s220 = sshll.u32 [#allocation8], 4
          %s221 = int_to_ptr.vmem [resolvable:$true] %s220
          %226 = dma.hbm_to_vmem [thread:$0]  %s219, 512, %s221, [#allocation9], 128, 128, 8
        $region20: #{tpu_custom_call.1} parent=11 // pred_fallthru
          _
        // Predicated region
        $region21: #{tpu_custom_call.1} parent=11 // pred_check
          %p227 = pneg %p137
        $region22: #{tpu_custom_call.1} parent=11 // pred_check_branch
          %229 = sbr.rel (%p227) target = $region24
        $region23: #{tpu_custom_call.1} parent=11 // pred_region
          %231 = vsyncadd [#allocation9], 0
          %s232 = sshll.u32 %s4, 4
          %s233 = int_to_ptr.hbm [resolvable:$true] %s232
          %s234 = sshll.u32 [#allocation10], 4
          %s235 = int_to_ptr.vmem [resolvable:$true] %s234
          %240 = dma.hbm_to_vmem [thread:$0]  %s233, 512, %s235, [#allocation9], 128, 128, 8
        $region24: #{tpu_custom_call.1} parent=11 // pred_fallthru
          _
        // Predicated region
        $region25: #{tpu_custom_call.1} parent=11 // pred_check
          %p241 = pneg %p158
        $region26: #{tpu_custom_call.1} parent=11 // pred_check_branch
          %243 = sbr.rel (%p241) target = $region28
        $region27: #{tpu_custom_call.1} parent=11 // pred_region
          _
        $region28: #{tpu_custom_call.1} parent=11 // pred_fallthru
          _
      $region12: #{tpu_custom_call.1} parent=5 // pred_fallthru
        _
      %p244 = scmp.lt.s32.totalorder %s22, 2
      // Predicated region
      $region29: #{tpu_custom_call.1} parent=5 // pred_check
        %p245 = pneg %p244
      $region30: #{tpu_custom_call.1} parent=5 // pred_check_branch
        %247 = sbr.rel (%p245) target = $region32
      $region31: #{tpu_custom_call.1} parent=5 // pred_region
        // Predicated region
        $region33: #{tpu_custom_call.1} parent=31 // pred_check
          %p248 = pneg %p42
        $region34: #{tpu_custom_call.1} parent=31 // pred_check_branch
          %250 = sbr.rel (%p248) target = $region36
        $region35: #{tpu_custom_call.1} parent=31 // pred_region
          %s251 = sand.u32 %s32, 1
          %s252 = scalar_lea.sflag [#allocation3], %s251
          %s253 = sand.u32 %s32, 1
          %s254 = smul.addr %s253, 8
          %s255 = scalar_lea.vmem [#allocation2], %s254
          %257 = vsyncadd %s252, 0
          %s258 = smul.addr %s22, 8
          %s259 = scalar_lea.hbm %s0, %s258
          %s261 = sshll.u32 %s259, 4
          %s262 = int_to_ptr.hbm [resolvable:$true] %s261
          %s263 = sshll.u32 %s255, 4
          %s264 = int_to_ptr.vmem [resolvable:$true] %s263
          %266 = dma.hbm_to_vmem [thread:$0]  %s262, 128, %s264, %s252
        $region36: #{tpu_custom_call.1} parent=31 // pred_fallthru
          _
        // Predicated region
        $region37: #{tpu_custom_call.1} parent=31 // pred_check
          %p267 = pneg %p68
        $region38: #{tpu_custom_call.1} parent=31 // pred_check_branch
          %269 = sbr.rel (%p267) target = $region40
        $region39: #{tpu_custom_call.1} parent=31 // pred_region
          %s270 = sand.u32 %s22, 1
          %s271 = scalar_lea.sflag [#allocation6], %s270
          %s272 = sand.u32 %s58, 1
          %s273 = smul.addr %s272, 8
          %s274 = scalar_lea.vmem [#allocation5], %s273
          %276 = vsyncadd %s271, 0
          %s277 = smul.addr %s22, 8
          %s278 = scalar_lea.hbm %s1, %s277
          %s280 = sshll.u32 %s278, 4
          %s281 = int_to_ptr.hbm [resolvable:$true] %s280
          %s282 = sshll.u32 %s274, 4
          %s283 = int_to_ptr.vmem [resolvable:$true] %s282
          %285 = dma.hbm_to_vmem [thread:$0]  %s281, 128, %s283, %s271
        $region40: #{tpu_custom_call.1} parent=31 // pred_fallthru
          _
      $region32: #{tpu_custom_call.1} parent=5 // pred_fallthru
        _
      %p286 = scmp.le.s32.totalorder 1, %s22
      %p287 = scmp.lt.s32.totalorder %s22, 3
      %p288 = pnand %p286, %p287
      %p289 = pneg %p288
      // Predicated region
      $region41: #{tpu_custom_call.1} parent=5 // pred_check
        _
      $region42: #{tpu_custom_call.1} parent=5 // pred_check_branch
        %291 = sbr.rel (%p288) target = $region44
      $region43: #{tpu_custom_call.1} parent=5 // pred_region
        %s292 = ssub.s32 %s22, 1
        %s293 = sand.u32 %s35, 1
        %s294 = scalar_lea.sflag [#allocation3], %s293
        %s295 = sand.u32 %s35, 1
        %s296 = smul.addr %s295, 8
        %s297 = scalar_lea.vmem [#allocation2], %s296
        // Predicated region
        $region45: #{tpu_custom_call.1} parent=43 // pred_check
          %p298 = pneg %p48
        $region46: #{tpu_custom_call.1} parent=43 // pred_check_branch
          %300 = sbr.rel (%p298) target = $region48
        $region47: #{tpu_custom_call.1} parent=43 // pred_region
          %302 = dma.done %s294, 128
        $region48: #{tpu_custom_call.1} parent=43 // pred_fallthru
          _
        %s303 = sand.u32 %s27, 1
        %s304 = scalar_lea.sflag [#allocation6], %s303
        %s305 = sand.u32 %s61, 1
        %s306 = smul.addr %s305, 8
        %s307 = scalar_lea.vmem [#allocation5], %s306
        // Predicated region
        $region49: #{tpu_custom_call.1} parent=43 // pred_check
          %p308 = pneg %p74
        $region50: #{tpu_custom_call.1} parent=43 // pred_check_branch
          %310 = sbr.rel (%p308) target = $region52
        $region51: #{tpu_custom_call.1} parent=43 // pred_region
          %312 = dma.done %s304, 128
        $region52: #{tpu_custom_call.1} parent=43 // pred_fallthru
          _
        // Predicated region
        $region53: #{tpu_custom_call.1} parent=43 // pred_check
          %p313 = pneg %p95
        $region54: #{tpu_custom_call.1} parent=43 // pred_check_branch
          %315 = sbr.rel (%p313) target = $region56
        $region55: #{tpu_custom_call.1} parent=43 // pred_region
          %317 = dma.done [#allocation6], 512
        $region56: #{tpu_custom_call.1} parent=43 // pred_fallthru
          _
        // Predicated region
        $region57: #{tpu_custom_call.1} parent=43 // pred_check
          %p318 = pneg %p116
        $region58: #{tpu_custom_call.1} parent=43 // pred_check_branch
          %320 = sbr.rel (%p318) target = $region60
        $region59: #{tpu_custom_call.1} parent=43 // pred_region
          %322 = dma.done [#allocation9], 512
        $region60: #{tpu_custom_call.1} parent=43 // pred_fallthru
          _
        // Predicated region
        $region61: #{tpu_custom_call.1} parent=43 // pred_check
          %p323 = pneg %p137
        $region62: #{tpu_custom_call.1} parent=43 // pred_check_branch
          %325 = sbr.rel (%p323) target = $region64
        $region63: #{tpu_custom_call.1} parent=43 // pred_region
          %327 = dma.done [#allocation9], 512
        $region64: #{tpu_custom_call.1} parent=43 // pred_fallthru
          _
        %s328 = sand.u32 %s35, 1
        %s329 = scalar_lea.sflag [#allocation3], %s328
        %s330 = sand.u32 %s35, 1
        %s331 = smul.addr %s330, 8
        %s332 = scalar_lea.vmem [#allocation2], %s331
        %p333 = pneg %p48
        %p334 = pneg %p45
        %s335 = sand.u32 %s27, 1
        %s336 = scalar_lea.sflag [#allocation6], %s335
        %s337 = sand.u32 %s61, 1
        %s338 = smul.addr %s337, 8
        %s339 = scalar_lea.vmem [#allocation5], %s338
        %p340 = pneg %p74
        %p341 = pneg %p71
        %p342 = pneg %p95
        %p343 = pneg %p92
        %p344 = pneg %p116
        %p345 = pneg %p113
        %p346 = pneg %p137
        %p347 = pneg %p134
        %p348 = pneg %p158
        %p349 = pneg %p155
        %p350 = pneg %p184
        %p351 = pneg %p181
        %s352 = sand.u32 %s171, 1
        %s353 = scalar_lea.sflag [#allocation4], %s352
        %s354 = sand.u32 %s171, 1
        %s355 = smul.addr %s354, 8
        %s356 = scalar_lea.vmem [#allocation11], %s355
        %v357 = vld [vmem:[%s297] sm:$0xff]
        %v358 = vld [vmem:[%s307] sm:$0xff]
        %v359 = vld [vmem:[#allocation7] sm:$0xff]
        %v360 = vld [vmem:[#allocation7 + $0x8] sm:$0xff]
        %v361 = vld [vmem:[#allocation7 + $0x10] sm:$0xff]
        %v362 = vld [vmem:[#allocation7 + $0x18] sm:$0xff]
        %v363 = vld [vmem:[#allocation8] sm:$0xff]
        %v364 = vld [vmem:[#allocation8 + $0x8] sm:$0xff]
        %v365 = vld [vmem:[#allocation8 + $0x10] sm:$0xff]
        %v366 = vld [vmem:[#allocation8 + $0x18] sm:$0xff]
        %vm367 = vcmask 261120
        %v369 = vsel %vm367, %v358, 0
        %371 = vmatpush.msra.mxu0 0.0
        %372 = vmatpush.msra.mxu0 0.0
        %373 = vmatpush.msra.mxu0 0.0
        %374 = vmatpush.msra.mxu0 0.0
        %375 = vmatpush.msra.mxu0 0.0
        %376 = vmatpush.msra.mxu0 0.0
        %377 = vmatpush.msra.mxu0 0.0
        %378 = vmatpush.msra.mxu0 0.0
        %379 = vmatpush.msra.mxu0 0.0
        %380 = vmatpush.msra.mxu0 0.0
        %381 = vmatpush.msra.mxu0 0.0
        %382 = vmatpush.msra.mxu0 0.0
        %383 = vmatpush.msra.mxu0 %v366
        %384 = vmatpush.msra.mxu0 %v365
        %385 = vmatpush.msra.mxu0 %v364
        %386 = vmatpush.msra.mxu0 %v363
        %387 = vmatmul.f32.gmra.mxu0 %v369
        %v388 = vpop.f32.mrf.mxu0
        %v389 = vadd.f32 0.0, %v388
        %390 = vdwg.mxu0
        %v392 = vsel %vm367, %v357, 0
        %394 = vmatpush.msra.mxu0 0.0
        %395 = vmatpush.msra.mxu0 0.0
        %396 = vmatpush.msra.mxu0 0.0
        %397 = vmatpush.msra.mxu0 0.0
        %398 = vmatpush.msra.mxu0 0.0
        %399 = vmatpush.msra.mxu0 0.0
        %400 = vmatpush.msra.mxu0 0.0
        %401 = vmatpush.msra.mxu0 0.0
        %402 = vmatpush.msra.mxu0 0.0
        %403 = vmatpush.msra.mxu0 0.0
        %404 = vmatpush.msra.mxu0 0.0
        %405 = vmatpush.msra.mxu0 0.0
        %406 = vmatpush.msra.mxu0 %v362
        %407 = vmatpush.msra.mxu0 %v361
        %408 = vmatpush.msra.mxu0 %v360
        %409 = vmatpush.msra.mxu0 %v359
        %410 = vmatmul.f32.gmra.mxu0 %v392
        %v411 = vpop.f32.mrf.mxu0
        %v412 = vadd.f32 %v389, %v411
        %413 = vdwg.mxu0
        %v414 = vmul.f32 %v357, %v358
        %v415 = vld [vmem:[#allocation10] sm:$0xff]
        %v416 = vld [vmem:[#allocation10 + $0x8] sm:$0xff]
        %v417 = vld [vmem:[#allocation10 + $0x10] sm:$0xff]
        %v418 = vld [vmem:[#allocation10 + $0x18] sm:$0xff]
        %v420 = vsel %vm367, %v414, 0
        %422 = vmatpush.msra.mxu0 0.0
        %423 = vmatpush.msra.mxu0 0.0
        %424 = vmatpush.msra.mxu0 0.0
        %425 = vmatpush.msra.mxu0 0.0
        %426 = vmatpush.msra.mxu0 0.0
        %427 = vmatpush.msra.mxu0 0.0
        %428 = vmatpush.msra.mxu0 0.0
        %429 = vmatpush.msra.mxu0 0.0
        %430 = vmatpush.msra.mxu0 0.0
        %431 = vmatpush.msra.mxu0 0.0
        %432 = vmatpush.msra.mxu0 0.0
        %433 = vmatpush.msra.mxu0 0.0
        %434 = vmatpush.msra.mxu0 %v418
        %435 = vmatpush.msra.mxu0 %v417
        %436 = vmatpush.msra.mxu0 %v416
        %437 = vmatpush.msra.mxu0 %v415
        %438 = vmatmul.f32.gmra.mxu0 %v420
        %v439 = vpop.f32.mrf.mxu0
        %v440 = vadd.f32 0.0, %v439
        %441 = vdwg.mxu0
        %v442 = vadd.f32 %v412, %v440
        %v443 = vld [vmem:[%s5] sm:$0x1]
        %v445 = vperm.slane %v443, 0
        %v447 = vadd.f32 %v442, %v445
        %v448 = vxor.u32 %v447, 2147483648
        %v449 = vmul.f32 %v448, 1.442695
        %v450 = vpow.pop %v449
        %v451 = vadd.f32 %v450, 1.0
        %v452 = vrcp.pop %v451
        %v453 = vmul.f32 %v451, %v452
        %v454 = vsub.f32 1.0, %v453
        %v455 = vmul.f32 %v452, %v454
        %v456 = vadd.f32 %v452, %v455
        %vm457 = vweird.f32 %v451
        %vm458 = vweird.f32 %v452
        %vm459 = vmor %vm457, %vm458
        %v460 = vsel %vm459, %v452, %v456
        %v461 = vand.u32 2147483647, %v451
        %vm462 = vcmp.eq.f32.partialorder %v461, 8.507059e+37
        %v463 = vand.u32 %v451, 2147483648
        %v464 = vor.u32 1.1754944e-38, %v463
        %v465 = vsel %vm462, %v464, %v460
        %v466 = vmul.f32 1.0, %v465
        %v467 = vsub.f32 %v358, %v357
        %v468 = vmul.f32 %v466, %v467
        %v469 = vadd.f32 %v357, %v468
        %470 = vst.msk [vmem:[%s356] sm:$0xff] %vm367, %v469
        %s471 = sand.u32 %s171, 1
        %s472 = scalar_lea.sflag [#allocation4], %s471
        %s473 = sand.u32 %s171, 1
        %s474 = smul.addr %s473, 8
        %s475 = scalar_lea.vmem [#allocation11], %s474
        // Predicated region
        $region65: #{tpu_custom_call.1} parent=43 // pred_check
          %p476 = pneg %p181
        $region66: #{tpu_custom_call.1} parent=43 // pred_check_branch
          %478 = sbr.rel (%p476) target = $region68
        $region67: #{tpu_custom_call.1} parent=43 // pred_region
          %480 = vsyncadd %s472, 0
          %s481 = smul.addr %s27, 8
          %s482 = scalar_lea.hbm %s6, %s481
          %s484 = sshll.u32 %s475, 4
          %s485 = int_to_ptr.vmem [resolvable:$true] %s484
          %s486 = sshll.u32 %s482, 4
          %s487 = int_to_ptr.hbm [resolvable:$true] %s486
          %489 = dma.vmem_to_hbm [thread:$0]  %s485, 128, %s487, %s472
        $region68: #{tpu_custom_call.1} parent=43 // pred_fallthru
          _
      $region44: #{tpu_custom_call.1} parent=5 // pred_fallthru
        _
      %p490 = scmp.le.s32.totalorder 2, %s22
      // Predicated region
      $region69: #{tpu_custom_call.1} parent=5 // pred_check
        %p491 = pneg %p490
      $region70: #{tpu_custom_call.1} parent=5 // pred_check_branch
        %493 = sbr.rel (%p491) target = $region72
      $region71: #{tpu_custom_call.1} parent=5 // pred_region
        %s494 = ssub.s32 %s22, 2
        // Predicated region
        $region73: #{tpu_custom_call.1} parent=71 // pred_check
          %p495 = pneg %p187
        $region74: #{tpu_custom_call.1} parent=71 // pred_check_branch
          %497 = sbr.rel (%p495) target = $region76
        $region75: #{tpu_custom_call.1} parent=71 // pred_region
          %s498 = sand.u32 %s172, 1
          %s499 = scalar_lea.sflag [#allocation4], %s498
          %s500 = sand.u32 %s172, 1
          %s501 = smul.addr %s500, 8
          %s502 = scalar_lea.vmem [#allocation11], %s501
          %504 = dma.done %s499, 128
        $region76: #{tpu_custom_call.1} parent=71 // pred_fallthru
          _
      $region72: #{tpu_custom_call.1} parent=5 // pred_fallthru
        _
    $region6: #{tpu_custom_call.1} parent=1 // loop_footer
      %s26 = sadd.s32 1, %s22
    $region7: #{tpu_custom_call.1} parent=1 // loop_footer_branch
      %21 = sbr.rel target = $region3
    $region8: #{tpu_custom_call.1} parent=1 // loop_exit
      _
    %505 = vsyncpa [#allocation3], 1
    %s506 = scalar_lea.sflag [#allocation3], 1
    %507 = vsyncpa %s506, 1
    %508 = vsyncpa [#allocation6], 1
    %s509 = scalar_lea.sflag [#allocation6], 1
    %510 = vsyncpa %s509, 1
    %511 = vsyncpa [#allocation9], 1
    %512 = vsyncpa [#allocation4], 1
    %s513 = scalar_lea.sflag [#allocation4], 1
    %514 = vsyncpa %s513, 1

</llo_original>
